<compile_context>
chip_gen: v5e
topology: v5e:2x2
jax: 0.10.0
libtpu: 0.0.40
codegen_flags: <defaults>
</compile_context>

<pallas_src>
import jax
import jax.numpy as jnp
from jax.experimental import pallas as pl
from jax.experimental.pallas import tpu as pltpu

_LANE = 128


def _copy_kernel(x_ref, o_ref):
    # Pure pass-through of the current VMEM block.
    o_ref[...] = x_ref[...]


def identity_forward(gaussians: jax.Array, iteration=None, camera=None) -> jax.Array:
    """Identity.forward(gaussians, iteration, camera) -> gaussians.

    Production path: no kernel, no HBM traffic, optimal on every TPU
    generation.  Returns the *same* (aliased) buffer, matching nn.Identity
    semantics — callers must not assume a fresh output.
    """
    return gaussians


def identity_regularization() -> dict:
    """Identity.regularization() -> {} (no losses)."""
    return {}


def _round_up(x: int, m: int) -> int:
    return -(-x // m) * m


def _pick_tile_rows(n_rows: int, row_bytes: int, sub: int, max_tile_bytes: int) -> int:
    if n_rows <= sub:
        # Full array dim is always a legal block dim.
        return n_rows
    max_rows = max(sub, max_tile_bytes // max(row_bytes, 1))
    tile = min(n_rows, max_rows)
    return max(sub, (tile // sub) * sub)  # keep a multiple of the sublane tile


def identity_copy(
    gaussians: jax.Array,
    *,
    max_tile_bytes: int = 2 << 20,  # ~2 MiB/block; in+out double-buffered ≈ 8 MiB VMEM
) -> jax.Array:
    """Materialized identity copy through a Pallas streaming pipeline.

    Opt-in only: prefer `identity_forward` (free).  If a caller merely needs a
    fresh un-fused buffer, a plain XLA copy is also already at HBM roofline;
    this kernel exists for cases that must stay inside a Pallas pipeline.
    """
    orig_shape = gaussians.shape
    dtype = gaussians.dtype
    itemsize = jnp.dtype(dtype).itemsize

    # Present a 2-D (rows, last_dim) view.  Collapsing leading dims is free for
    # contiguous arrays — no pad, no output slice, HBM traffic stays at 2x bytes.
    if gaussians.ndim == 0:
        x2d = gaussians.reshape(1, 1)
    elif gaussians.ndim == 1:
        x2d = gaussians.reshape(1, -1)
    else:
        x2d = gaussians.reshape(-1, orig_shape[-1])

    n, d = x2d.shape
    # Min sublane tile: f32 -> 8, bf16 -> 16, int8 -> 32.
    sub = max(8, 32 // max(itemsize, 1))
    row_bytes = d * itemsize

    if row_bytes * sub > max_tile_bytes and d % _LANE == 0 and d > _LANE:
        # Very wide rows: tile the column axis too (tile_d a multiple of 128)
        # instead of letting an 8-row mega-block blow past the VMEM budget.
        tile_d = min(d, max(_LANE, (max_tile_bytes // (sub * itemsize)) // _LANE * _LANE))
        tile_n = n if n <= sub else sub
        grid = (pl.cdiv(n, tile_n), pl.cdiv(d, tile_d))
        block = (tile_n, tile_d)
        index_map = lambda i, j: (i, j)
        dim_sem = ("parallel", "parallel")
    else:
        tile_n = _pick_tile_rows(n, row_bytes, sub, max_tile_bytes)
        # v7x megacore: ensure >= 2 grid steps when there is enough work so
        # both TensorCores stream (no-op on single-TC v5e/v6e).
        if pl.cdiv(n, tile_n) < 2 and n > sub:
            half = _round_up(-(-n // 2), sub)
            tile_n = max(sub, min(tile_n, half))
        grid = (pl.cdiv(n, tile_n),)
        block = (tile_n, d)
        index_map = lambda i: (i, 0)
        dim_sem = ("parallel",)

    # Only raise the scoped-VMEM limit if the (caller-chosen) tile needs it;
    # the 2 MiB default fits v5e's 16 MiB scoped default with room to spare.
    tile_bytes = block[0] * block[1] * itemsize
    needed = 4 * tile_bytes  # in + out, double-buffered
    compiler_kwargs = dict(dimension_semantics=dim_sem)
    if needed > (12 << 20):
        compiler_kwargs["vmem_limit_bytes"] = min(needed + (8 << 20), 48 << 20)

    out2d = pl.pallas_call(
        _copy_kernel,
        out_shape=jax.ShapeDtypeStruct((n, d), dtype),
        grid=grid,
        in_specs=[pl.BlockSpec(block, index_map)],
        out_specs=pl.BlockSpec(block, index_map),
        compiler_params=pltpu.CompilerParams(**compiler_kwargs),
    )(x2d)

    return out2d.reshape(orig_shape)


if __name__ == "__main__":
    key = jax.random.PRNGKey(0)
    k1, k2 = jax.random.split(key)

    # Small synthetic gaussian blob: 256 points x 59 packed attributes
    # (xyz 3 + scale 3 + rot 4 + opacity 1 + SH 48) — deliberately not a
    # multiple of 128; copied directly on its native shape (no repack).
    gaussians = jax.random.normal(k1, (256, 59), dtype=jnp.float32)

    # 1) Production identity path (no kernel, no HBM traffic).
    out = jax.block_until_ready(identity_forward(gaussians, iteration=0, camera=None))
    assert out.shape == gaussians.shape and out.dtype == gaussians.dtype
    assert bool(jnp.array_equal(out, gaussians))

    # 2) Opt-in materialized copy through the Pallas streaming kernel.
    out_copy = jax.block_until_ready(identity_copy(gaussians))
    assert out_copy.shape == gaussians.shape and out_copy.dtype == gaussians.dtype
    assert bool(jnp.array_equal(out_copy, gaussians))

    # 3) Lane-aligned 3-D input exercises the free leading-dim collapse path.
    x3 = jax.random.normal(k2, (2, 64, 256), dtype=jnp.bfloat16)
    out3 = jax.block_until_ready(identity_copy(x3))
    assert out3.shape == x3.shape and out3.dtype == x3.dtype
    assert bool(jnp.array_equal(out3, x3))

    assert identity_regularization() == {}

    print("KERNEL_OK")
</pallas_src>

<mosaic_0001>
module attributes {stable_mosaic.version = 11 : i64} {
  func.func @_copy_kernel(%arg0: i32, %arg1: memref<128x59xf32, #tpu.memory_space<vmem>>, %arg2: memref<128x59xf32, #tpu.memory_space<vmem>>) attributes {dimension_semantics = [#tpu.dimension_semantics<parallel>], iteration_bounds = array<i64: 2>, scalar_prefetch = 0 : i64, scratch_operands = 0 : i64, tpu.core_type = #tpu.core_type<tc>, window_params = [{transform_indices = @transform_0, window_bounds = array<i64: 128, 59>}, {transform_indices = @transform_1, window_bounds = array<i64: 128, 59>}]} {
    %c0 = arith.constant 0 : index
    %c0_0 = arith.constant 0 : index
    %0 = vector.load %arg1[%c0, %c0_0] : memref<128x59xf32, #tpu.memory_space<vmem>>, vector<128x59xf32>
    %c0_1 = arith.constant 0 : index
    %c0_2 = arith.constant 0 : index
    %1 = vector.load %arg2[%c0_1, %c0_2] : memref<128x59xf32, #tpu.memory_space<vmem>>, vector<128x59xf32>
    tpu.vector_store %arg2[%c0_1, %c0_2], %0 {strides = array<i32>} : memref<128x59xf32, #tpu.memory_space<vmem>>, vector<128x59xf32>,
    return
  }
  func.func @transform_0(%arg0: i32) -> (i32, i32) {
    %c0_i32 = arith.constant 0 : i32
    %c0_i32_0 = arith.constant 0 : i32
    return %arg0, %c0_i32 : i32, i32
  }
  func.func @transform_1(%arg0: i32) -> (i32, i32) {
    %c0_i32 = arith.constant 0 : i32
    %c0_i32_0 = arith.constant 0 : i32
    return %arg0, %c0_i32 : i32, i32
  }
}

</mosaic_0001>

<llo_original>
// kernel: tpu_custom_call.1
$region0: #{tpu_custom_call.1}
  #allocation0 [shape = 'u32[]', space=smem, size = 0x4, offset = 0x4, fixed_abs, tag = 'smem constant byte address 0x4 - core index']
  #allocation1 [shape = 'u32[72,128]{1,0:T(1,128)}', space=vmem, size = 0x9000, scoped, tag = 'internal scratch']
  %s0 = inlined_call_operand.vmem [shape: f32[256,59], index: 0, kind: input, shape index: {}]
  %s1 = inlined_call_operand.vmem [shape: f32[256,59], index: 1, kind: output, shape index: {}]
  %s2 = sld [smem:[#allocation0]]
  $region37: #{tpu_custom_call.1} parent=0
    _
  %s4 = ssub.s32 1, %s2
  %s5 = scalar_select 0, %s4, %s2
  loop: start=0, step=1, limit=4
  $region2: #{tpu_custom_call.1} parent=0 // loop_pre_header
    _
  $region3: #{tpu_custom_call.1} parent=0 // loop_header
    %s7 = sphi 0, %s11
    %p8 = scmp.ge.s32.totalorder %s7, 4
    %s17 = sphi 0, %s19
    %s20 = sphi 0, %s17
    %s21 = sphi 0, %s20
    %s37 = sphi 0, %s21
    %s43 = sphi 0, %s45
    %s46 = sphi 0, %s43
    %s47 = sphi 0, %s46
    %s63 = sphi 0, %s47
  $region4: #{tpu_custom_call.1} parent=0 // loop_header_branch
    %10 = sbr.rel (%p8) target = $region8
  $region5: #{tpu_custom_call.1} parent=0 // loop_body
    %s12 = ssub.s32 %s7, 1
    %s13 = ssub.s32 %s7, 2
    %s14 = sadd.s32 %s7, 1
    %s15 = ssub.s32 %s7, %s14
    %p16 = scmp.eq.s32.totalorder %s15, 0
    %s18 = sadd.s32 %s17, 1
    %s19 = scalar_select %p16, %s17, %s18
    %p22 = pneg %p16
    %p23 = scmp.eq.s32.totalorder %s7, 1
    %p24 = por %p22, %p23
    %p25 = scmp.ne.s32.totalorder %s17, %s20
    %p26 = scmp.eq.s32.totalorder %s7, 0
    %p27 = por %p25, %p26
    %p28 = scmp.ne.s32.totalorder %s17, %s20
    %p29 = scmp.eq.s32.totalorder %s12, 1
    %p30 = por %p28, %p29
    %p31 = scmp.ne.s32.totalorder %s20, %s21
    %p32 = scmp.eq.s32.totalorder %s12, 0
    %p33 = por %p31, %p32
    %p34 = scmp.ne.s32.totalorder %s20, %s21
    %p35 = scmp.eq.s32.totalorder %s13, 1
    %p36 = por %p34, %p35
    %p38 = scmp.ne.s32.totalorder %s21, %s37
    %p39 = scmp.eq.s32.totalorder %s13, 0
    %p40 = por %p38, %p39
    %s41 = ssub.s32 %s7, %s14
    %p42 = scmp.eq.s32.totalorder %s41, 0
    %s44 = sadd.s32 %s43, 1
    %s45 = scalar_select %p42, %s43, %s44
    %p48 = pneg %p42
    %p49 = scmp.eq.s32.totalorder %s7, 1
    %p50 = por %p48, %p49
    %p51 = scmp.ne.s32.totalorder %s43, %s46
    %p52 = scmp.eq.s32.totalorder %s7, 0
    %p53 = por %p51, %p52
    %p54 = scmp.ne.s32.totalorder %s43, %s46
    %p55 = scmp.eq.s32.totalorder %s12, 1
    %p56 = por %p54, %p55
    %p57 = scmp.ne.s32.totalorder %s46, %s47
    %p58 = scmp.eq.s32.totalorder %s12, 0
    %p59 = por %p57, %p58
    %p60 = scmp.ne.s32.totalorder %s46, %s47
    %p61 = scmp.eq.s32.totalorder %s13, 1
    %p62 = por %p60, %p61
    %p64 = scmp.ne.s32.totalorder %s47, %s63
    %p65 = scmp.eq.s32.totalorder %s13, 0
    %p66 = por %p64, %p65
    %p67 = scmp.le.s32.totalorder 1, %s7
    %p68 = scmp.lt.s32.totalorder %s7, 3
    %p69 = pnand %p67, %p68
    %p70 = pneg %p69
    // Predicated region
    $region9: #{tpu_custom_call.1} parent=5 // pred_check
      _
    $region10: #{tpu_custom_call.1} parent=5 // pred_check_branch
      %72 = sbr.rel (%p69) target = $region12
    $region11: #{tpu_custom_call.1} parent=5 // pred_region
      %s73 = ssub.s32 %s7, 1
    $region12: #{tpu_custom_call.1} parent=5 // pred_fallthru
      _
    %p74 = scmp.lt.s32.totalorder %s7, 2
    // Predicated region
    $region13: #{tpu_custom_call.1} parent=5 // pred_check
      %p75 = pneg %p74
    $region14: #{tpu_custom_call.1} parent=5 // pred_check_branch
      %77 = sbr.rel (%p75) target = $region16
    $region15: #{tpu_custom_call.1} parent=5 // pred_region
      // Predicated region
      $region17: #{tpu_custom_call.1} parent=15 // pred_check
        %p78 = pneg %p27
      $region18: #{tpu_custom_call.1} parent=15 // pred_check_branch
        %80 = sbr.rel (%p78) target = $region20
      $region19: #{tpu_custom_call.1} parent=15 // pred_region
        %s81 = smul.u32 16, %s7
        %p82 = scmp.lt.s32.totalorder %s81, 31
        %s83 = scalar_select %p82, %s81, 31
        %s84 = smul.addr %s83, 8
        %s85 = scalar_lea.vmem %s0, %s84
        %s86 = smul.u32 16, %s7
      $region20: #{tpu_custom_call.1} parent=15 // pred_fallthru
        _
    $region16: #{tpu_custom_call.1} parent=5 // pred_fallthru
      _
    %p87 = scmp.le.s32.totalorder 1, %s7
    %p88 = scmp.lt.s32.totalorder %s7, 3
    %p89 = pnand %p87, %p88
    %p90 = pneg %p89
    // Predicated region
    $region21: #{tpu_custom_call.1} parent=5 // pred_check
      _
    $region22: #{tpu_custom_call.1} parent=5 // pred_check_branch
      %92 = sbr.rel (%p89) target = $region24
    $region23: #{tpu_custom_call.1} parent=5 // pred_region
      %s93 = ssub.s32 %s7, 1
      %s94 = smul.u32 16, %s12
      %p95 = scmp.lt.s32.totalorder %s94, 31
      %s96 = scalar_select %p95, %s94, 31
      %s97 = smul.addr %s96, 8
      %s98 = scalar_lea.vmem %s0, %s97
      %p99 = pneg %p33
      %p100 = pneg %p30
      %p101 = pneg %p59
      %p102 = pneg %p56
      %s103 = smul.u32 16, %s12
      %p104 = scmp.lt.s32.totalorder %s103, 31
      %s105 = scalar_select %p104, %s103, 31
      %s106 = smul.addr %s105, 8
      %s107 = scalar_lea.vmem %s1, %s106
      %s108 = smul.u32 16, %s12
      %p109 = scmp.lt.s32.totalorder %s108, 31
      %s110 = scalar_select %p109, %s108, 31
      %s111 = smul.addr %s110, 8
      %s112 = scalar_lea.vmem %s0, %s111
      %s113 = smul.u32 16, %s12
      %s114 = smul.u32 16, %s12
      %p115 = scmp.lt.s32.totalorder %s114, 31
      %s116 = scalar_select %p115, %s114, 31
      %s117 = smul.addr %s116, 8
      %s118 = scalar_lea.vmem %s1, %s117
      %s119 = smul.u32 16, %s12
      %v120 = vld [vmem:[%s112] sm:$0xff]
      %v121 = vld [vmem:[%s112 + $0x8] sm:$0xff]
      %v122 = vld [vmem:[%s112 + $0x10] sm:$0xff]
      %v123 = vld [vmem:[%s112 + $0x18] sm:$0xff]
      %v124 = vld [vmem:[%s112 + $0x20] sm:$0xff]
      %v125 = vld [vmem:[%s112 + $0x28] sm:$0xff]
      %v126 = vld [vmem:[%s112 + $0x30] sm:$0xff]
      %v127 = vld [vmem:[%s112 + $0x38] sm:$0xff]
      %v128 = vld [vmem:[%s112 + $0x40] sm:$0xff]
      %v129 = vld [vmem:[%s112 + $0x48] sm:$0xff]
      %v130 = vld [vmem:[%s112 + $0x50] sm:$0xff]
      %v131 = vld [vmem:[%s112 + $0x58] sm:$0xff]
      %v132 = vld [vmem:[%s112 + $0x60] sm:$0xff]
      %v133 = vld [vmem:[%s112 + $0x68] sm:$0xff]
      %v134 = vld [vmem:[%s112 + $0x70] sm:$0xff]
      %v135 = vld [vmem:[%s112 + $0x78] sm:$0xff]
      %vm136 = vcmask 482304
      %137 = vst.msk [vmem:[%s118] sm:$0xff] %vm136, %v120
      %138 = vst.msk [vmem:[%s118 + $0x8] sm:$0xff] %vm136, %v121
      %139 = vst.msk [vmem:[%s118 + $0x10] sm:$0xff] %vm136, %v122
      %140 = vst.msk [vmem:[%s118 + $0x18] sm:$0xff] %vm136, %v123
      %141 = vst.msk [vmem:[%s118 + $0x20] sm:$0xff] %vm136, %v124
      %142 = vst.msk [vmem:[%s118 + $0x28] sm:$0xff] %vm136, %v125
      %143 = vst.msk [vmem:[%s118 + $0x30] sm:$0xff] %vm136, %v126
      %144 = vst.msk [vmem:[%s118 + $0x38] sm:$0xff] %vm136, %v127
      %145 = vst.msk [vmem:[%s118 + $0x40] sm:$0xff] %vm136, %v128
      %146 = vst.msk [vmem:[%s118 + $0x48] sm:$0xff] %vm136, %v129
      %147 = vst.msk [vmem:[%s118 + $0x50] sm:$0xff] %vm136, %v130
      %148 = vst.msk [vmem:[%s118 + $0x58] sm:$0xff] %vm136, %v131
      %149 = vst.msk [vmem:[%s118 + $0x60] sm:$0xff] %vm136, %v132
      %150 = vst.msk [vmem:[%s118 + $0x68] sm:$0xff] %vm136, %v133
      %151 = vst.msk [vmem:[%s118 + $0x70] sm:$0xff] %vm136, %v134
      %152 = vst.msk [vmem:[%s118 + $0x78] sm:$0xff] %vm136, %v135
      %s153 = smul.u32 16, %s12
      %p154 = scmp.lt.s32.totalorder %s153, 31
      %s155 = scalar_select %p154, %s153, 31
      %s156 = smul.addr %s155, 8
      %s157 = scalar_lea.vmem %s1, %s156
      // Predicated region
      $region25: #{tpu_custom_call.1} parent=23 // pred_check
        %p158 = pneg %p56
      $region26: #{tpu_custom_call.1} parent=23 // pred_check_branch
        %160 = sbr.rel (%p158) target = $region28
      $region27: #{tpu_custom_call.1} parent=23 // pred_region
        %s161 = smul.u32 16, %s12
      $region28: #{tpu_custom_call.1} parent=23 // pred_fallthru
        _
    $region24: #{tpu_custom_call.1} parent=5 // pred_fallthru
      _
    %p162 = scmp.le.s32.totalorder 2, %s7
    // Predicated region
    $region29: #{tpu_custom_call.1} parent=5 // pred_check
      %p163 = pneg %p162
    $region30: #{tpu_custom_call.1} parent=5 // pred_check_branch
      %165 = sbr.rel (%p163) target = $region32
    $region31: #{tpu_custom_call.1} parent=5 // pred_region
      %s166 = ssub.s32 %s7, 2
      // Predicated region
      $region33: #{tpu_custom_call.1} parent=31 // pred_check
        %p167 = pneg %p62
      $region34: #{tpu_custom_call.1} parent=31 // pred_check_branch
        %169 = sbr.rel (%p167) target = $region36
      $region35: #{tpu_custom_call.1} parent=31 // pred_region
        %s170 = smul.u32 16, %s13
        %p171 = scmp.lt.s32.totalorder %s170, 31
        %s172 = scalar_select %p171, %s170, 31
        %s173 = smul.addr %s172, 8
        %s174 = scalar_lea.vmem %s1, %s173
      $region36: #{tpu_custom_call.1} parent=31 // pred_fallthru
        _
    $region32: #{tpu_custom_call.1} parent=5 // pred_fallthru
      _
  $region6: #{tpu_custom_call.1} parent=0 // loop_footer
    %s11 = sadd.s32 1, %s7
  $region7: #{tpu_custom_call.1} parent=0 // loop_footer_branch
    %6 = sbr.rel target = $region3
  $region8: #{tpu_custom_call.1} parent=0 // loop_exit
    _

</llo_original>
